<compile_context>
chip_gen: v7x
topology: tpu7x:2x2x1
jax: 0.10.0
libtpu: 0.0.40
codegen_flags: <defaults>
</compile_context>

<pallas_src>
import math
from functools import partial

import jax
import jax.numpy as jnp
from jax.experimental import pallas as pl
from jax.experimental.pallas import tpu as pltpu


# ----------------------------------------------------------------------------
# VMEM-aware tile budgets
# ----------------------------------------------------------------------------

def _vmem_capacity_bytes():
    try:
        return int(pltpu.get_tpu_info().vmem_capacity_bytes)
    except Exception:
        return 128 * 1024 * 1024  # v5e/v6e default


_VMEM_BYTES = _vmem_capacity_bytes()
# Scoped-VMEM budget we hand to Mosaic; leave headroom below physical.
_VMEM_LIMIT = int(min(_VMEM_BYTES, 128 * 1024 * 1024) // 2)

_TM_CAP = 512      # row tile cap     (multiple of 8)
_TN_CAP = 512      # col tile cap     (multiple of 128)
_TK_CAP = 512      # K tile cap       (multiple of 128)
_TH_CAP = 1024     # FFN hidden tile cap
_TROW_CAP = 512    # row tile for standalone LN


def _round_up(x, m):
    return ((x + m - 1) // m) * m


def _tile(dim, cap, align):
    """Return (tile, padded_dim).  Full-extent block when dim <= cap (exempt
    from the (8,128) rule).  Otherwise prefer an `align`-multiple tile that
    divides `dim` exactly (no padding); fall back to cap + padding."""
    if dim <= cap:
        return dim, dim
    t = (cap // align) * align
    while t >= align:
        if dim % t == 0:
            return t, dim
        t -= align
    return cap, _round_up(dim, cap)


def _maybe_pad2d(x, rows, cols):
    r, c = x.shape
    if r == rows and c == cols:
        return x
    return jnp.pad(x, ((0, rows - r), (0, cols - c)))


def _ffn_tiles(M, D, H):
    """Footprint-aware row / hidden tiles for the FFN kernel (D is never
    tiled: x(tm,D), res(tm,D), out(tm,D) bf16 double-buffered + acc(tm,D) f32
    + w1(D,th), w2(th,D) bf16 double-buffered must fit the scoped budget)."""
    budget = int(_VMEM_LIMIT * 0.7)
    per_row = 16 * D                       # 3 * (2buf * bf16) + f32 acc
    tm_cap = _TM_CAP
    while tm_cap > 8 and per_row * tm_cap > budget // 2:
        tm_cap //= 2
    tm, Mp = _tile(M, tm_cap, 8)
    remain = max(budget - per_row * tm, 0)
    per_th = 8 * D + 8                     # w1 + w2 bf16, double-buffered
    th_cap = max(128, min(_TH_CAP, (remain // per_th) // 128 * 128))
    th, Hp = _tile(H, th_cap, 128)
    return tm, Mp, th, Hp
    # TODO(synk): if D itself is too large for untiled-D buffers (v7x, huge
    # d_model), the FFN would additionally need D tiling; not needed here.


# ----------------------------------------------------------------------------
# Pallas kernels
# ----------------------------------------------------------------------------

def _matmul_bias_kernel(x_ref, w_ref, b_ref, o_ref, acc_ref):
    @pl.when(pl.program_id(2) == 0)
    def _init():
        acc_ref[...] = jnp.zeros_like(acc_ref)

    acc_ref[...] += jnp.dot(x_ref[...], w_ref[...],
                            preferred_element_type=jnp.float32)

    @pl.when(pl.program_id(2) == pl.num_programs(2) - 1)
    def _fin():
        o_ref[...] = (acc_ref[...] + b_ref[...]).astype(o_ref.dtype)


def matmul_bias(x, w, b, out_dtype=jnp.bfloat16):
    """y = x @ w + b.  x:(M,K) bf16, w:(K,N) bf16, b:(1,N) f32."""
    M, K = x.shape
    N = w.shape[1]
    tm, Mp = _tile(M, _TM_CAP, 8)
    tn, Np = _tile(N, _TN_CAP, 128)
    tk, Kp = _tile(K, _TK_CAP, 128)
    if x.dtype != jnp.bfloat16:
        x = x.astype(jnp.bfloat16)
    xp = _maybe_pad2d(x, Mp, Kp)
    wp = _maybe_pad2d(w.astype(jnp.bfloat16), Kp, Np)
    bp = _maybe_pad2d(b.astype(jnp.float32), 1, Np)
    out = pl.pallas_call(
        _matmul_bias_kernel,
        grid_spec=pltpu.PrefetchScalarGridSpec(
            num_scalar_prefetch=0,
            grid=(Mp // tm, Np // tn, Kp // tk),
            in_specs=[
                pl.BlockSpec((tm, tk), lambda i, j, k: (i, k)),
                pl.BlockSpec((tk, tn), lambda i, j, k: (k, j)),
                pl.BlockSpec((1, tn), lambda i, j, k: (0, j)),
            ],
            out_specs=pl.BlockSpec((tm, tn), lambda i, j, k: (i, j)),
            scratch_shapes=[pltpu.VMEM((tm, tn), jnp.float32)],
        ),
        out_shape=jax.ShapeDtypeStruct((Mp, Np), out_dtype),
        compiler_params=pltpu.CompilerParams(
            dimension_semantics=("parallel", "parallel", "arbitrary"),
            vmem_limit_bytes=_VMEM_LIMIT),
    )(xp, wp, bp)
    if Mp != M or Np != N:
        out = out[:M, :N]
    return out


def _ln_epilogue(y, g, beta, out_dtype):
    """Row LayerNorm (two-pass, centered variance) in f32."""
    inv_n = 1.0 / y.shape[-1]
    mu = jnp.sum(y, axis=-1, keepdims=True) * inv_n
    d = y - mu
    var = jnp.sum(d * d, axis=-1, keepdims=True) * inv_n
    yn = d * jax.lax.rsqrt(var + 1e-5)
    return (yn * g + beta).astype(out_dtype)


def _matmul_bias_ln_kernel(x_ref, w_ref, b_ref, r_ref, g_ref, bt_ref,
                           o_ref, acc_ref):
    k = pl.program_id(1)

    @pl.when(k == 0)
    def _init():
        acc_ref[...] = jnp.zeros_like(acc_ref)

    acc_ref[...] += jnp.dot(x_ref[...], w_ref[...],
                            preferred_element_type=jnp.float32)

    @pl.when(k == pl.num_programs(1) - 1)
    def _fin():
        y = acc_ref[...] + b_ref[...] + r_ref[...].astype(jnp.float32)
        o_ref[...] = _ln_epilogue(y, g_ref[...], bt_ref[...], o_ref.dtype)


def matmul_bias_add_ln(x, w, b, r, g, beta, out_dtype=jnp.bfloat16):
    """LayerNorm((x @ w + b) + r) * g + beta, fused (requires N <= _TN_CAP)."""
    M, K = x.shape
    N = w.shape[1]
    if N > _TN_CAP:   # fallback: un-fused (full row needed for LN)
        y = matmul_bias(x, w, b, out_dtype=jnp.float32)
        return add_layernorm2d(y, r, g, beta, out_dtype)
    tm, Mp = _tile(M, _TM_CAP, 8)
    tk, Kp = _tile(K, _TK_CAP, 128)
    if x.dtype != jnp.bfloat16:
        x = x.astype(jnp.bfloat16)
    xp = _maybe_pad2d(x, Mp, Kp)
    rp = _maybe_pad2d(r, Mp, N)
    wp = _maybe_pad2d(w.astype(jnp.bfloat16), Kp, N)
    out = pl.pallas_call(
        _matmul_bias_ln_kernel,
        grid_spec=pltpu.PrefetchScalarGridSpec(
            num_scalar_prefetch=0,
            grid=(Mp // tm, Kp // tk),
            in_specs=[
                pl.BlockSpec((tm, tk), lambda i, k: (i, k)),
                pl.BlockSpec((tk, N), lambda i, k: (k, 0)),
                pl.BlockSpec((1, N), lambda i, k: (0, 0)),
                pl.BlockSpec((tm, N), lambda i, k: (i, 0)),
                pl.BlockSpec((1, N), lambda i, k: (0, 0)),
                pl.BlockSpec((1, N), lambda i, k: (0, 0)),
            ],
            out_specs=pl.BlockSpec((tm, N), lambda i, k: (i, 0)),
            scratch_shapes=[pltpu.VMEM((tm, N), jnp.float32)],
        ),
        out_shape=jax.ShapeDtypeStruct((Mp, N), out_dtype),
        compiler_params=pltpu.CompilerParams(
            dimension_semantics=("parallel", "arbitrary"),
            vmem_limit_bytes=_VMEM_LIMIT),
    )(xp, wp, b.astype(jnp.float32), rp, g, beta)
    if Mp != M:
        out = out[:M]
    return out


def _ffn_ln_kernel(x_ref, w1_ref, b1_ref, w2_ref, b2_ref, r_ref, g_ref,
                   bt_ref, o_ref, acc_ref):
    j = pl.program_id(1)

    @pl.when(j == 0)
    def _init():
        acc_ref[...] = jnp.zeros_like(acc_ref)

    h = jnp.dot(x_ref[...], w1_ref[...],
                preferred_element_type=jnp.float32) + b1_ref[...]
    h = jnp.maximum(h, 0.0).astype(jnp.bfloat16)
    acc_ref[...] += jnp.dot(h, w2_ref[...], preferred_element_type=jnp.float32)

    @pl.when(j == pl.num_programs(1) - 1)
    def _fin():
        y = acc_ref[...] + b2_ref[...] + r_ref[...].astype(jnp.float32)
        o_ref[...] = _ln_epilogue(y, g_ref[...], bt_ref[...], o_ref.dtype)


def ffn2d_add_ln(x, w1, b1, w2, b2, r, g, beta, out_dtype=jnp.bfloat16):
    """LayerNorm(relu(x@w1+b1)@w2+b2 + r); tiled over rows and hidden dim so
    the (M, 4D) intermediate never touches HBM."""
    M, D = x.shape
    H = w1.shape[1]
    tm, Mp, th, Hp = _ffn_tiles(M, D, H)
    if x.dtype != jnp.bfloat16:
        x = x.astype(jnp.bfloat16)
    xp = _maybe_pad2d(x, Mp, D)
    rp = _maybe_pad2d(r, Mp, D)
    w1p = _maybe_pad2d(w1.astype(jnp.bfloat16), D, Hp)
    b1p = _maybe_pad2d(b1.astype(jnp.float32), 1, Hp)
    w2p = _maybe_pad2d(w2.astype(jnp.bfloat16), Hp, D)
    out = pl.pallas_call(
        _ffn_ln_kernel,
        grid_spec=pltpu.PrefetchScalarGridSpec(
            num_scalar_prefetch=0,
            grid=(Mp // tm, Hp // th),
            in_specs=[
                pl.BlockSpec((tm, D), lambda i, j: (i, 0)),
                pl.BlockSpec((D, th), lambda i, j: (0, j)),
                pl.BlockSpec((1, th), lambda i, j: (0, j)),
                pl.BlockSpec((th, D), lambda i, j: (j, 0)),
                pl.BlockSpec((1, D), lambda i, j: (0, 0)),
                pl.BlockSpec((tm, D), lambda i, j: (i, 0)),
                pl.BlockSpec((1, D), lambda i, j: (0, 0)),
                pl.BlockSpec((1, D), lambda i, j: (0, 0)),
            ],
            out_specs=pl.BlockSpec((tm, D), lambda i, j: (i, 0)),
            scratch_shapes=[pltpu.VMEM((tm, D), jnp.float32)],
        ),
        out_shape=jax.ShapeDtypeStruct((Mp, D), out_dtype),
        compiler_params=pltpu.CompilerParams(
            dimension_semantics=("parallel", "arbitrary"),
            vmem_limit_bytes=_VMEM_LIMIT),
    )(xp, w1p, b1p, w2p, b2.astype(jnp.float32), rp, g, beta)
    if Mp != M:
        out = out[:M]
    return out


def _add_ln_kernel(x_ref, r_ref, g_ref, b_ref, o_ref):
    y = x_ref[...].astype(jnp.float32) + r_ref[...].astype(jnp.float32)
    o_ref[...] = _ln_epilogue(y, g_ref[...], b_ref[...], o_ref.dtype)


def add_layernorm2d(x, r, g, b, out_dtype=jnp.bfloat16):
    """Standalone fused residual-add + LayerNorm (fallback path)."""
    M, D = x.shape
    tm, Mp = _tile(M, _TROW_CAP, 8)
    xp = _maybe_pad2d(x, Mp, D)
    rp = _maybe_pad2d(r, Mp, D)
    out = pl.pallas_call(
        _add_ln_kernel,
        grid=(Mp // tm,),
        in_specs=[
            pl.BlockSpec((tm, D), lambda i: (i, 0)),
            pl.BlockSpec((tm, D), lambda i: (i, 0)),
            pl.BlockSpec((1, D), lambda i: (0, 0)),
            pl.BlockSpec((1, D), lambda i: (0, 0)),
        ],
        out_specs=pl.BlockSpec((tm, D), lambda i: (i, 0)),
        out_shape=jax.ShapeDtypeStruct((Mp, D), out_dtype),
        compiler_params=pltpu.CompilerParams(
            dimension_semantics=("parallel",),
            vmem_limit_bytes=_VMEM_LIMIT),
    )(xp, rp, g, b)
    if Mp != M:
        out = out[:M]
    return out


def _state_gate_kernel(s_ref, c_ref, wz_ref, bz_ref, o_ref):
    z = jax.nn.sigmoid(
        jnp.dot(s_ref[...], wz_ref[...],
                preferred_element_type=jnp.float32) + bz_ref[...])
    s = s_ref[...].astype(jnp.float32)
    c = c_ref[...].astype(jnp.float32)
    o_ref[...] = (z * s + (1.0 - z) * jnp.tanh(c)).astype(o_ref.dtype)


def state_gate(s, c, wz, bz, out_dtype=jnp.bfloat16):
    M, D = s.shape
    tm, Mp = _tile(M, _TM_CAP, 8)
    sp = _maybe_pad2d(s, Mp, D)
    cp = _maybe_pad2d(c, Mp, D)
    # TODO(synk): wz is an untiled (D, D) block; tile K for very large d_model.
    out = pl.pallas_call(
        _state_gate_kernel,
        grid=(Mp // tm,),
        in_specs=[
            pl.BlockSpec((tm, D), lambda i: (i, 0)),
            pl.BlockSpec((tm, D), lambda i: (i, 0)),
            pl.BlockSpec((D, D), lambda i: (0, 0)),
            pl.BlockSpec((1, D), lambda i: (0, 0)),
        ],
        out_specs=pl.BlockSpec((tm, D), lambda i: (i, 0)),
        out_shape=jax.ShapeDtypeStruct((Mp, D), out_dtype),
        compiler_params=pltpu.CompilerParams(
            dimension_semantics=("parallel",),
            vmem_limit_bytes=_VMEM_LIMIT),
    )(sp, cp, wz.astype(jnp.bfloat16), bz.astype(jnp.float32))
    if Mp != M:
        out = out[:M]
    return out


def _attn_head_kernel(q_ref, k_ref, v_ref, o_ref, *, causal, kv_offset):
    # One (batch, head) tile: q (1,Lq,dh), k/v (1,Lk,dh).  Scale is already
    # folded into the q-projection weights.
    q = q_ref[0]
    k = k_ref[0]
    v = v_ref[0]
    s = jax.lax.dot_general(q, k, (((1,), (1,)), ((), ())),
                            preferred_element_type=jnp.float32)
    if causal:
        qi = jax.lax.broadcasted_iota(jnp.int32, s.shape, 0)
        kj = jax.lax.broadcasted_iota(jnp.int32, s.shape, 1)
        s = jnp.where(kj > qi + kv_offset, -1e30, s)
    s = s - jnp.max(s, axis=-1, keepdims=True)
    p = jnp.exp(s)
    denom = jnp.sum(p, axis=-1, keepdims=True)
    p = (p * pl.reciprocal(denom, approx=True)).astype(jnp.bfloat16)
    o_ref[0] = jnp.dot(p, v, preferred_element_type=jnp.float32).astype(o_ref.dtype)


def _attn_batch_kernel(q_ref, k_ref, v_ref, o_ref, *, n_head, causal, kv_offset):
    # Fallback (head_dim not lane-aligned): all heads per batch element,
    # each head's context written straight to its output slice.
    D = q_ref.shape[2]
    dh = D // n_head
    q = q_ref[0]
    k = k_ref[0]
    v = v_ref[0]
    if causal:
        Lq, Lk = q.shape[0], k.shape[0]
        qi = jax.lax.broadcasted_iota(jnp.int32, (Lq, Lk), 0)
        kj = jax.lax.broadcasted_iota(jnp.int32, (Lq, Lk), 1)
        mask = kj > qi + kv_offset
    for h in range(n_head):
        sl = slice(h * dh, (h + 1) * dh)
        s = jax.lax.dot_general(q[:, sl], k[:, sl], (((1,), (1,)), ((), ())),
                                preferred_element_type=jnp.float32)
        if causal:
            s = jnp.where(mask, -1e30, s)
        s = s - jnp.max(s, axis=-1, keepdims=True)
        p = jnp.exp(s)
        denom = jnp.sum(p, axis=-1, keepdims=True)
        p = (p * pl.reciprocal(denom, approx=True)).astype(jnp.bfloat16)
        o_ref[0, :, sl] = jnp.dot(p, v[:, sl],
                                  preferred_element_type=jnp.float32).astype(o_ref.dtype)


def attention(q, k, v, n_head, causal, out_dtype=jnp.bfloat16):
    """softmax(q k^T [+ causal mask]) v with q already scaled.
    q:(B,Lq,D), k,v:(B,Lk,D), D = n_head*dh.
    TODO(synk): tile Lk flash-style (online softmax) if concat(mem, x) ever
    grows beyond a comfortable VMEM block; per-window lengths here are tiny."""
    B, Lq, D = q.shape
    Lk = k.shape[1]
    dh = D // n_head
    kv_offset = Lk - Lq
    if dh % 128 == 0:
        kern = partial(_attn_head_kernel, causal=causal, kv_offset=kv_offset)
        return pl.pallas_call(
            kern,
            grid=(B, n_head),
            in_specs=[
                pl.BlockSpec((1, Lq, dh), lambda b, h: (b, 0, h)),
                pl.BlockSpec((1, Lk, dh), lambda b, h: (b, 0, h)),
                pl.BlockSpec((1, Lk, dh), lambda b, h: (b, 0, h)),
            ],
            out_specs=pl.BlockSpec((1, Lq, dh), lambda b, h: (b, 0, h)),
            out_shape=jax.ShapeDtypeStruct((B, Lq, D), out_dtype),
            compiler_params=pltpu.CompilerParams(
                dimension_semantics=("parallel", "parallel"),
                vmem_limit_bytes=_VMEM_LIMIT),
        )(q, k, v)
    kern = partial(_attn_batch_kernel, n_head=n_head, causal=causal,
                   kv_offset=kv_offset)
    return pl.pallas_call(
        kern,
        grid=(B,),
        in_specs=[
            pl.BlockSpec((1, Lq, D), lambda b: (b, 0, 0)),
            pl.BlockSpec((1, Lk, D), lambda b: (b, 0, 0)),
            pl.BlockSpec((1, Lk, D), lambda b: (b, 0, 0)),
        ],
        out_specs=pl.BlockSpec((1, Lq, D), lambda b: (b, 0, 0)),
        out_shape=jax.ShapeDtypeStruct((B, Lq, D), out_dtype),
        compiler_params=pltpu.CompilerParams(
            dimension_semantics=("parallel",),
            vmem_limit_bytes=_VMEM_LIMIT),
    )(q, k, v)


# ----------------------------------------------------------------------------
# Model pieces (glue: reshapes / param handling in plain JAX)
# ----------------------------------------------------------------------------

def xl_layer(x, mem_kv, p, n_head):
    """XLAttentionLayer: causal attention over concat(mem, x), residual+LN, FFN.
    mem_kv is the *cached projected* K/V of last window's detached input (or
    None); returns (output, this-layer's K/V cache for next window)."""
    B, L, D = x.shape
    x2 = x.reshape(B * L, D)
    qkv = matmul_bias(x2, p['attn']['qkv']['w'], p['attn']['qkv']['b'])
    q = qkv[:, :D].reshape(B, L, D)
    kx = qkv[:, D:2 * D].reshape(B, L, D)
    vx = qkv[:, 2 * D:].reshape(B, L, D)
    new_cache = (jax.lax.stop_gradient(kx), jax.lax.stop_gradient(vx))  # x.detach()
    if mem_kv is None:
        k, v = kx, vx
    else:
        k = jnp.concatenate([mem_kv[0], kx], axis=1)
        v = jnp.concatenate([mem_kv[1], vx], axis=1)
    a = attention(q, k, v, n_head, causal=True)
    x = matmul_bias_add_ln(a.reshape(B * L, D), p['attn']['o']['w'],
                           p['attn']['o']['b'], x2,
                           p['ln1_g'], p['ln1_b'])
    x = ffn2d_add_ln(x, p['ffn']['l1']['w'], p['ffn']['l1']['b'],
                     p['ffn']['l2']['w'], p['ffn']['l2']['b'],
                     x, p['ln2_g'], p['ln2_b'])
    return x.reshape(B, L, D), new_cache


def recurrent_layer(x, state, p, n_head):
    """RecurrentLayer: x attends (causally) over concat(state, x); the state is
    updated via a gated cross-attention read over the same token set."""
    B, L, D = x.shape
    S = state.shape[1]
    x2 = x.reshape(B * L, D)
    s2 = state.reshape(B * S, D)

    # sequence path
    qkv_x = matmul_bias(x2, p['x_attn']['qkv']['w'], p['x_attn']['qkv']['b'])
    qx = qkv_x[:, :D].reshape(B, L, D)
    kx = qkv_x[:, D:2 * D].reshape(B, L, D)
    vx = qkv_x[:, 2 * D:].reshape(B, L, D)
    kv_s = matmul_bias(s2, p['x_attn']['kv']['w'], p['x_attn']['kv']['b'])
    ks = kv_s[:, :D].reshape(B, S, D)
    vs = kv_s[:, D:].reshape(B, S, D)
    a = attention(qx, jnp.concatenate([ks, kx], axis=1),
                  jnp.concatenate([vs, vx], axis=1), n_head, causal=True)
    x_out = matmul_bias_add_ln(a.reshape(B * L, D), p['x_attn']['o']['w'],
                               p['x_attn']['o']['b'], x2,
                               p['ln1_g'], p['ln1_b'])
    x_out = ffn2d_add_ln(x_out, p['ffn']['l1']['w'], p['ffn']['l1']['b'],
                         p['ffn']['l2']['w'], p['ffn']['l2']['b'],
                         x_out, p['ln2_g'], p['ln2_b']).reshape(B, L, D)

    # state path (gated update)
    qkv_s = matmul_bias(s2, p['s_attn']['qkv']['w'], p['s_attn']['qkv']['b'])
    qs = qkv_s[:, :D].reshape(B, S, D)
    ks2 = qkv_s[:, D:2 * D].reshape(B, S, D)
    vs2 = qkv_s[:, 2 * D:].reshape(B, S, D)
    kv_x2 = matmul_bias(x2, p['s_attn']['kv']['w'], p['s_attn']['kv']['b'])
    kx2 = kv_x2[:, :D].reshape(B, L, D)
    vx2 = kv_x2[:, D:].reshape(B, L, D)
    sa = attention(qs, jnp.concatenate([ks2, kx2], axis=1),
                   jnp.concatenate([vs2, vx2], axis=1), n_head, causal=False)
    c = matmul_bias(sa.reshape(B * S, D), p['s_attn']['o']['w'],
                    p['s_attn']['o']['b'])
    next_state = state_gate(s2, c, p['gate']['w'], p['gate']['b']).reshape(B, S, D)
    return x_out, next_state


def sinusoidal_pos(max_len, d_model):
    pos = jnp.arange(max_len, dtype=jnp.float32)[:, None]
    i = jnp.arange(0, d_model, 2, dtype=jnp.float32)
    div = jnp.exp(-math.log(10000.0) * i / d_model)
    pe = jnp.zeros((max_len, d_model), jnp.float32)
    pe = pe.at[:, 0::2].set(jnp.sin(pos * div))
    pe = pe.at[:, 1::2].set(jnp.cos(pos * div))
    return pe


def embedding(ids, params):
    # TODO(synk): token-embedding row gather stays in XLA (data-dependent gather).
    d_model = params['tok_emb'].shape[1]
    tok = jnp.take(params['tok_emb'], ids, axis=0) * math.sqrt(d_model)
    L = ids.shape[1]
    return (tok + params['pos_enc'][:L][None, :, :]).astype(jnp.bfloat16)


def block_memorizing_transformer_forward(params, ids, n_head, w, state=None,
                                         xlmems=None):
    x = embedding(ids, params)
    bsz, seqlen, dim = x.shape
    if state is None:
        state = jnp.broadcast_to(params['init_state'][None, :, :],
                                 (bsz,) + params['init_state'].shape
                                 ).astype(jnp.bfloat16)
    if xlmems is None:
        xlmems = []
    out = []
    for i in range(0, seqlen, w):
        xb = x[:, i:i + w]
        xl_iter = iter(xlmems)
        nextxlmems = []
        for lp in params['layers1']:
            xb, cache = xl_layer(xb, next(xl_iter, None), lp, n_head)
            nextxlmems.append(cache)         # cached K/V of detached input
        xb, state = recurrent_layer(xb, state, params['recurrent'], n_head)
        for lp in params['layers2']:
            xb, cache = xl_layer(xb, next(xl_iter, None), lp, n_head)
            nextxlmems.append(cache)
        out.append(xb)
        xlmems = nextxlmems
    out = jnp.concatenate(out, axis=1).astype(jnp.float32)
    assert out.shape == (bsz, seqlen, dim)
    return out, state, xlmems


# ----------------------------------------------------------------------------
# Deterministic parameter initialization
# (weights pre-converted to bf16, QKV fused, softmax scale folded into Q)
# ----------------------------------------------------------------------------

def _init_linear(key, d_in, d_out):
    w = (jax.random.normal(key, (d_in, d_out), jnp.float32) * 0.02
         ).astype(jnp.bfloat16)
    return {'w': w, 'b': jnp.zeros((1, d_out), jnp.float32)}


def _init_mha(key, d_model, n_head):
    ks = jax.random.split(key, 3)
    scale = 1.0 / math.sqrt(d_model // n_head)
    qw = jax.random.normal(ks[0], (d_model, d_model), jnp.float32) * 0.02
    kvw = jax.random.normal(ks[1], (d_model, 2 * d_model), jnp.float32) * 0.02
    ow = jax.random.normal(ks[2], (d_model, d_model), jnp.float32) * 0.02
    return {
        'qkv': {'w': jnp.concatenate([qw * scale, kvw], axis=1).astype(jnp.bfloat16),
                'b': jnp.zeros((1, 3 * d_model), jnp.float32)},
        'kv': {'w': kvw.astype(jnp.bfloat16),
               'b': jnp.zeros((1, 2 * d_model), jnp.float32)},
        'o': {'w': ow.astype(jnp.bfloat16),
              'b': jnp.zeros((1, d_model), jnp.float32)},
    }


def _init_xl_layer(key, d_model, ffn_hidden, n_head):
    ks = jax.random.split(key, 3)
    return {'attn': _init_mha(ks[0], d_model, n_head),
            'ffn': {'l1': _init_linear(ks[1], d_model, ffn_hidden),
                    'l2': _init_linear(ks[2], ffn_hidden, d_model)},
            'ln1_g': jnp.ones((1, d_model), jnp.float32),
            'ln1_b': jnp.zeros((1, d_model), jnp.float32),
            'ln2_g': jnp.ones((1, d_model), jnp.float32),
            'ln2_b': jnp.zeros((1, d_model), jnp.float32)}


def _init_recurrent(key, d_model, ffn_hidden, n_head):
    ks = jax.random.split(key, 5)
    return {'x_attn': _init_mha(ks[0], d_model, n_head),
            's_attn': _init_mha(ks[1], d_model, n_head),
            'ffn': {'l1': _init_linear(ks[2], d_model, ffn_hidden),
                    'l2': _init_linear(ks[3], ffn_hidden, d_model)},
            'gate': _init_linear(ks[4], d_model, d_model),
            'ln1_g': jnp.ones((1, d_model), jnp.float32),
            'ln1_b': jnp.zeros((1, d_model), jnp.float32),
            'ln2_g': jnp.ones((1, d_model), jnp.float32),
            'ln2_b': jnp.zeros((1, d_model), jnp.float32)}


def init_params(key, vocab_size, max_len, n_layers, d_model, n_head, statelen):
    ffn_hidden = 4 * d_model
    n1 = n_layers // 2
    n2 = n_layers - n1
    ks = jax.random.split(key, 3 + n1 + n2)
    return {
        'tok_emb': jax.random.normal(ks[0], (vocab_size, d_model), jnp.float32) * 0.02,
        'pos_enc': sinusoidal_pos(max_len, d_model),
        'init_state': jax.random.normal(ks[1], (statelen, d_model), jnp.float32),
        'recurrent': _init_recurrent(ks[2], d_model, ffn_hidden, n_head),
        'layers1': [_init_xl_layer(ks[3 + i], d_model, ffn_hidden, n_head)
                    for i in range(n1)],
        'layers2': [_init_xl_layer(ks[3 + n1 + i], d_model, ffn_hidden, n_head)
                    for i in range(n2)],
    }


# ----------------------------------------------------------------------------
# Demo
# ----------------------------------------------------------------------------

if __name__ == "__main__":
    vocab_size = 64
    max_len = 64
    n_layers = 4
    d_model = 256
    n_head = 2          # head_dim = 128 -> lane-aligned per-head attention grid
    w = 16
    statelen = 16
    bsz = 2
    seqlen = 32         # two blocks of size w -> exercises xlmems K/V cache

    root = jax.random.PRNGKey(0)
    kparams, kids = jax.random.split(root)
    params = init_params(kparams, vocab_size, max_len, n_layers, d_model,
                         n_head, statelen)
    ids = jax.random.randint(kids, (bsz, seqlen), 0, vocab_size, dtype=jnp.int32)

    out, state, xlmems = block_memorizing_transformer_forward(params, ids, n_head, w)
    jax.block_until_ready(out)
    jax.block_until_ready(state)

    assert out.shape == (bsz, seqlen, d_model)
    assert state.shape == (bsz, statelen, d_model)
    assert len(xlmems) == n_layers
    assert bool(jnp.all(jnp.isfinite(out)))
    print("KERNEL_OK")
</pallas_src>

<mosaic_0001>
module attributes {stable_mosaic.version = 11 : i64} {
  func.func @_matmul_bias_kernel(%arg0: i32, %arg1: i32, %arg2: i32, %arg3: memref<32x256xbf16, #tpu.memory_space<vmem>>, %arg4: memref<256x384xbf16, #tpu.memory_space<vmem>>, %arg5: memref<1x384xf32, #tpu.memory_space<vmem>>, %arg6: memref<32x384xbf16, #tpu.memory_space<vmem>>, %arg7: memref<32x384xf32, #tpu.memory_space<vmem>>) attributes {dimension_semantics = [#tpu.dimension_semantics<parallel>, #tpu.dimension_semantics<parallel>, #tpu.dimension_semantics<arbitrary>], iteration_bounds = array<i64: 1, 2, 1>, scalar_prefetch = 0 : i64, scratch_operands = 1 : i64, tpu.core_type = #tpu.core_type<tc>, window_params = [{transform_indices = @transform_0, window_bounds = array<i64: 32, 256>}, {transform_indices = @transform_1, window_bounds = array<i64: 256, 384>}, {transform_indices = @transform_2, window_bounds = array<i64: 1, 384>}, {transform_indices = @transform_3, window_bounds = array<i64: 32, 384>}]} {
    %c0_i32 = arith.constant 0 : i32
    %0 = arith.cmpi eq, %arg2, %c0_i32 : i32
    %1 = arith.extui %0 : i1 to i32
    %c0_i32_0 = arith.constant 0 : i32
    %2 = arith.cmpi ne, %1, %c0_i32_0 : i32
    scf.if %2 {
      %cst_10 = arith.constant 0.000000e+00 : f32
      %12 = vector.broadcast %cst_10 : f32 to vector<32x384xf32>
      %c0_11 = arith.constant 0 : index
      %c0_12 = arith.constant 0 : index
      %13 = vector.load %arg7[%c0_11, %c0_12] : memref<32x384xf32, #tpu.memory_space<vmem>>, vector<32x384xf32>
      tpu.vector_store %arg7[%c0_11, %c0_12], %12 {strides = array<i32>} : memref<32x384xf32, #tpu.memory_space<vmem>>, vector<32x384xf32>,
    } else {
    }
    %c0 = arith.constant 0 : index
    %c0_1 = arith.constant 0 : index
    %3 = vector.load %arg7[%c0, %c0_1] : memref<32x384xf32, #tpu.memory_space<vmem>>, vector<32x384xf32>
    %c0_2 = arith.constant 0 : index
    %c0_3 = arith.constant 0 : index
    %4 = vector.load %arg3[%c0_2, %c0_3] : memref<32x256xbf16, #tpu.memory_space<vmem>>, vector<32x256xbf16>
    %c0_4 = arith.constant 0 : index
    %c0_5 = arith.constant 0 : index
    %5 = vector.load %arg4[%c0_4, %c0_5] : memref<256x384xbf16, #tpu.memory_space<vmem>>, vector<256x384xbf16>
    %cst = arith.constant dense<0.000000e+00> : vector<32x384xf32>
    %6 = tpu.matmul %4, %5, %cst {dimension_numbers = #tpu.dot_dimension_numbers<[1], [0], [0], [1], [0, 0, 1, 1], [], []>} : vector<32x256xbf16>, vector<256x384xbf16>, vector<32x384xf32> -> vector<32x384xf32>
    %7 = arith.addf %3, %6 : vector<32x384xf32>
    %c0_6 = arith.constant 0 : index
    %c0_7 = arith.constant 0 : index
    %8 = vector.load %arg7[%c0_6, %c0_7] : memref<32x384xf32, #tpu.memory_space<vmem>>, vector<32x384xf32>
    tpu.vector_store %arg7[%c0_6, %c0_7], %7 {strides = array<i32>} : memref<32x384xf32, #tpu.memory_space<vmem>>, vector<32x384xf32>,
    %c0_i32_8 = arith.constant 0 : i32
    %9 = arith.cmpi eq, %arg2, %c0_i32_8 : i32
    %10 = arith.extui %9 : i1 to i32
    %c0_i32_9 = arith.constant 0 : i32
    %11 = arith.cmpi ne, %10, %c0_i32_9 : i32
    scf.if %11 {
      %c0_10 = arith.constant 0 : index
      %c0_11 = arith.constant 0 : index
      %12 = vector.load %arg7[%c0_10, %c0_11] : memref<32x384xf32, #tpu.memory_space<vmem>>, vector<32x384xf32>
      %c0_12 = arith.constant 0 : index
      %c0_13 = arith.constant 0 : index
      %13 = vector.load %arg5[%c0_12, %c0_13] : memref<1x384xf32, #tpu.memory_space<vmem>>, vector<1x384xf32>
      %14 = vector.broadcast %13 : vector<1x384xf32> to vector<32x384xf32>
      %15 = arith.addf %12, %14 : vector<32x384xf32>
      %16 = arith.truncf %15 : vector<32x384xf32> to vector<32x384xbf16>
      %c0_14 = arith.constant 0 : index
      %c0_15 = arith.constant 0 : index
      %17 = vector.load %arg6[%c0_14, %c0_15] : memref<32x384xbf16, #tpu.memory_space<vmem>>, vector<32x384xbf16>
      tpu.vector_store %arg6[%c0_14, %c0_15], %16 {strides = array<i32>} : memref<32x384xbf16, #tpu.memory_space<vmem>>, vector<32x384xbf16>,
    } else {
    }
    return
  }
  func.func @transform_0(%arg0: i32, %arg1: i32, %arg2: i32) -> (i32, i32) {
    %c0_i32 = arith.constant 0 : i32
    return %arg0, %arg2 : i32, i32
  }
  func.func @transform_1(%arg0: i32, %arg1: i32, %arg2: i32) -> (i32, i32) {
    %c0_i32 = arith.constant 0 : i32
    return %arg2, %arg1 : i32, i32
  }
  func.func @transform_2(%arg0: i32, %arg1: i32, %arg2: i32) -> (i32, i32) {
    %c0_i32 = arith.constant 0 : i32
    %c0_i32_0 = arith.constant 0 : i32
    return %c0_i32, %arg1 : i32, i32
  }
  func.func @transform_3(%arg0: i32, %arg1: i32, %arg2: i32) -> (i32, i32) {
    %c0_i32 = arith.constant 0 : i32
    return %arg0, %arg1 : i32, i32
  }
}

</mosaic_0001>

<llo_original>
// kernel: tpu_custom_call.1
$region0: #{tpu_custom_call.1}
  #allocation0 [shape = 'u32[]', space=smem, size = 0x4, offset = 0x4, fixed_abs, tag = 'smem constant byte address 0x4 - core index']
  #allocation1 [shape = 'u32[144,128]{1,0:T(1,128)}', space=vmem, size = 0x12000, scoped, tag = 'internal scratch']
  #allocation2 [shape = 'f32[32,384]{1,0:T(8,128)}', space=vmem, size = 0xc000, scoped, tag = 'scratch operand']
  %s0 = inlined_call_operand.hbm [shape: bf16[32,256], index: 0, kind: input, shape index: {}]
  %s1 = inlined_call_operand.hbm [shape: bf16[256,768], index: 1, kind: input, shape index: {}]
  %s2 = inlined_call_operand.hbm [shape: f32[1,768], index: 2, kind: input, shape index: {}]
  %s3 = inlined_call_operand.hbm [shape: bf16[32,768], index: 3, kind: output, shape index: {}]
  %s4 = sld [smem:[#allocation0]]
  $region65: #{tpu_custom_call.1} parent=0
    _
  %s6 = ssub.s32 1, %s4
  %s7 = scalar_select 0, %s6, %s4
  $region1: #{tpu_custom_call.1} parent=0
    #allocation3 [shape = 'u8[16384]{0}', space=vmem, size = 0x4000, scoped, tag = 'input window, operand 0, single buffered']
    #allocation4 [shape = 's32[2]{0}', space=sflag, size = 0x8, scoped, tag = 'scoped memory for tpu_custom_call.1']
    #allocation5 [shape = 's32[2]{0}', space=sflag, size = 0x8, scoped, tag = 'scoped memory for tpu_custom_call.1']
    #allocation6 [shape = 'u8[393216]{0}', space=vmem, size = 0x60000, scoped, tag = 'input window, operand 1']
    #allocation7 [shape = 's32[2]{0}', space=sflag, size = 0x8, scoped, tag = 'scoped memory for tpu_custom_call.1']
    #allocation8 [shape = 'u8[3072]{0}', space=vmem, size = 0xc00, scoped, tag = 'input window, operand 2']
    #allocation9 [shape = 'u8[49152]{0}', space=vmem, size = 0xc000, scoped, tag = 'output window, operand 0']
    %8 = vsyncpa [#allocation4], 0
    %9 = vsyncpa [#allocation7], 0
    %s10 = scalar_lea.sflag [#allocation7], 1
    %11 = vsyncpa %s10, 0
    %12 = vsyncpa [#allocation5], 0
    %s13 = scalar_lea.sflag [#allocation5], 1
    %14 = vsyncpa %s13, 0
    loop: start=0, step=1, limit=4
    $region2: #{tpu_custom_call.1} parent=1 // loop_pre_header
      _
    $region3: #{tpu_custom_call.1} parent=1 // loop_header
      %s16 = sphi 0, %s20
      %p17 = scmp.ge.s32.totalorder %s16, 4
      %s23 = sphi 0, %s42
      %s24 = sphi 0, %s38
      %s25 = sphi 0, %s34
      %s26 = sphi 0, %s23
      %s27 = sphi 0, %s24
      %s28 = sphi 0, %s25
      %s29 = sphi 0, %s26
      %s30 = sphi 0, %s27
      %s31 = sphi 0, %s28
      %s47 = sphi 0, %s49
      %s50 = sphi 0, %s47
      %s51 = sphi 0, %s50
      %s67 = sphi 0, %s51
      %s75 = sphi 0, %s77
      %s78 = sphi 0, %s75
      %s79 = sphi 0, %s78
      %s95 = sphi 0, %s79
      %s101 = sphi 0, %s103
      %s104 = sphi 0, %s101
      %s105 = sphi 0, %s104
      %s121 = sphi 0, %s105
      %s129 = sphi 0, %s131
      %s132 = sphi 0, %s129
      %s133 = sphi 0, %s132
      %s149 = sphi 0, %s133
    $region4: #{tpu_custom_call.1} parent=1 // loop_header_branch
      %19 = sbr.rel (%p17) target = $region8
    $region5: #{tpu_custom_call.1} parent=1 // loop_body
      %s21 = ssub.s32 %s16, 1
      %s22 = ssub.s32 %s16, 2
      %s32 = sadd.s32 1, %s25
      %p33 = scmp.ge.s32.totalorder %s32, 1
      %s34 = scalar_select %p33, 0, %s32
      %s35 = sadd.s32 1, %s24
      %s36 = scalar_select %p33, %s35, %s24
      %p37 = scmp.ge.s32.totalorder %s36, 2
      %s38 = scalar_select %p37, 0, %s36
      %s39 = sadd.s32 1, %s23
      %s40 = scalar_select %p37, %s39, %s23
      %p41 = scmp.ge.s32.totalorder %s40, 1
      %s42 = scalar_select %p41, 0, %s40
      %s43 = ssub.s32 %s23, %s42
      %s44 = ssub.s32 %s25, %s34
      %s45 = sor.u32 %s43, %s44
      %p46 = scmp.eq.s32.totalorder %s45, 0
      %s48 = sadd.s32 %s47, 1
      %s49 = scalar_select %p46, %s47, %s48
      %p52 = pneg %p46
      %p53 = scmp.eq.s32.totalorder %s16, 1
      %p54 = por %p52, %p53
      %p55 = scmp.ne.s32.totalorder %s47, %s50
      %p56 = scmp.eq.s32.totalorder %s16, 0
      %p57 = por %p55, %p56
      %p58 = scmp.ne.s32.totalorder %s47, %s50
      %p59 = scmp.eq.s32.totalorder %s21, 1
      %p60 = por %p58, %p59
      %p61 = scmp.ne.s32.totalorder %s50, %s51
      %p62 = scmp.eq.s32.totalorder %s21, 0
      %p63 = por %p61, %p62
      %p64 = scmp.ne.s32.totalorder %s50, %s51
      %p65 = scmp.eq.s32.totalorder %s22, 1
      %p66 = por %p64, %p65
      %p68 = scmp.ne.s32.totalorder %s51, %s67
      %p69 = scmp.eq.s32.totalorder %s22, 0
      %p70 = por %p68, %p69
      %s71 = ssub.s32 %s25, %s34
      %s72 = ssub.s32 %s24, %s38
      %s73 = sor.u32 %s71, %s72
      %p74 = scmp.eq.s32.totalorder %s73, 0
      %s76 = sadd.s32 %s75, 1
      %s77 = scalar_select %p74, %s75, %s76
      %p80 = pneg %p74
      %p81 = scmp.eq.s32.totalorder %s16, 1
      %p82 = por %p80, %p81
      %p83 = scmp.ne.s32.totalorder %s75, %s78
      %p84 = scmp.eq.s32.totalorder %s16, 0
      %p85 = por %p83, %p84
      %p86 = scmp.ne.s32.totalorder %s75, %s78
      %p87 = scmp.eq.s32.totalorder %s21, 1
      %p88 = por %p86, %p87
      %p89 = scmp.ne.s32.totalorder %s78, %s79
      %p90 = scmp.eq.s32.totalorder %s21, 0
      %p91 = por %p89, %p90
      %p92 = scmp.ne.s32.totalorder %s78, %s79
      %p93 = scmp.eq.s32.totalorder %s22, 1
      %p94 = por %p92, %p93
      %p96 = scmp.ne.s32.totalorder %s79, %s95
      %p97 = scmp.eq.s32.totalorder %s22, 0
      %p98 = por %p96, %p97
      %s99 = ssub.s32 %s24, %s38
      %p100 = scmp.eq.s32.totalorder %s99, 0
      %s102 = sadd.s32 %s101, 1
      %s103 = scalar_select %p100, %s101, %s102
      %p106 = pneg %p100
      %p107 = scmp.eq.s32.totalorder %s16, 1
      %p108 = por %p106, %p107
      %p109 = scmp.ne.s32.totalorder %s101, %s104
      %p110 = scmp.eq.s32.totalorder %s16, 0
      %p111 = por %p109, %p110
      %p112 = scmp.ne.s32.totalorder %s101, %s104
      %p113 = scmp.eq.s32.totalorder %s21, 1
      %p114 = por %p112, %p113
      %p115 = scmp.ne.s32.totalorder %s104, %s105
      %p116 = scmp.eq.s32.totalorder %s21, 0
      %p117 = por %p115, %p116
      %p118 = scmp.ne.s32.totalorder %s104, %s105
      %p119 = scmp.eq.s32.totalorder %s22, 1
      %p120 = por %p118, %p119
      %p122 = scmp.ne.s32.totalorder %s105, %s121
      %p123 = scmp.eq.s32.totalorder %s22, 0
      %p124 = por %p122, %p123
      %s125 = ssub.s32 %s23, %s42
      %s126 = ssub.s32 %s24, %s38
      %s127 = sor.u32 %s125, %s126
      %p128 = scmp.eq.s32.totalorder %s127, 0
      %s130 = sadd.s32 %s129, 1
      %s131 = scalar_select %p128, %s129, %s130
      %p134 = pneg %p128
      %p135 = scmp.eq.s32.totalorder %s16, 1
      %p136 = por %p134, %p135
      %p137 = scmp.ne.s32.totalorder %s129, %s132
      %p138 = scmp.eq.s32.totalorder %s16, 0
      %p139 = por %p137, %p138
      %p140 = scmp.ne.s32.totalorder %s129, %s132
      %p141 = scmp.eq.s32.totalorder %s21, 1
      %p142 = por %p140, %p141
      %p143 = scmp.ne.s32.totalorder %s132, %s133
      %p144 = scmp.eq.s32.totalorder %s21, 0
      %p145 = por %p143, %p144
      %p146 = scmp.ne.s32.totalorder %s132, %s133
      %p147 = scmp.eq.s32.totalorder %s22, 1
      %p148 = por %p146, %p147
      %p150 = scmp.ne.s32.totalorder %s133, %s149
      %p151 = scmp.eq.s32.totalorder %s22, 0
      %p152 = por %p150, %p151
      %p153 = scmp.le.s32.totalorder 1, %s16
      %p154 = scmp.lt.s32.totalorder %s16, 3
      %p155 = pnand %p153, %p154
      %p156 = pneg %p155
      // Predicated region
      $region9: #{tpu_custom_call.1} parent=5 // pred_check
        _
      $region10: #{tpu_custom_call.1} parent=5 // pred_check_branch
        %158 = sbr.rel (%p155) target = $region12
      $region11: #{tpu_custom_call.1} parent=5 // pred_region
        %s159 = ssub.s32 %s16, 1
        // Predicated region
        $region13: #{tpu_custom_call.1} parent=11 // pred_check
          %p160 = pneg %p63
        $region14: #{tpu_custom_call.1} parent=11 // pred_check_branch
          %162 = sbr.rel (%p160) target = $region16
        $region15: #{tpu_custom_call.1} parent=11 // pred_region
          %s163 = smul.u32 4, %s26
          %s164 = smul.u32 2, %s28
          %s166 = ssub.s32 512, 512
          %167 = vsyncadd [#allocation4], %s166
          %s168 = smul.addr %s163, 2
          %s169 = sadd.s32 %s164, %s168
          %s170 = smul.addr %s169, 64
          %s171 = scalar_lea.hbm %s0, %s170
          %s172 = sshll.u32 [#allocation3], 4
          %s173 = int_to_ptr.vmem [resolvable:$true] %s172
          %178 = dma.hbm_to_vmem [thread:$0]  %s171, 512, %s173, [#allocation4], 128, 128, 8
        $region16: #{tpu_custom_call.1} parent=11 // pred_fallthru
          _
      $region12: #{tpu_custom_call.1} parent=5 // pred_fallthru
        _
      %p179 = scmp.lt.s32.totalorder %s16, 2
      // Predicated region
      $region17: #{tpu_custom_call.1} parent=5 // pred_check
        %p180 = pneg %p179
      $region18: #{tpu_custom_call.1} parent=5 // pred_check_branch
        %182 = sbr.rel (%p180) target = $region20
      $region19: #{tpu_custom_call.1} parent=5 // pred_region
        // Predicated region
        $region21: #{tpu_custom_call.1} parent=19 // pred_check
          %p183 = pneg %p85
        $region22: #{tpu_custom_call.1} parent=19 // pred_check_branch
          %185 = sbr.rel (%p183) target = $region24
        $region23: #{tpu_custom_call.1} parent=19 // pred_region
          %s186 = sand.u32 %s16, 1
          %s187 = scalar_lea.sflag [#allocation7], %s186
          %s188 = sand.u32 %s75, 1
          %s189 = smul.addr %s188, 384
          %s190 = scalar_lea.vmem [#allocation6], %s189
          %s191 = smul.u32 32, %s25
          %s192 = smul.u32 3, %s24
          %s194 = ssub.s32 6144, 6144
          %195 = vsyncadd %s187, %s194
          %s196 = smul.addr %s191, 6
          %s197 = sadd.s32 %s192, %s196
          %s198 = smul.addr %s197, 64
          %s199 = scalar_lea.hbm %s1, %s198
          %s200 = sshll.u32 %s190, 4
          %s201 = int_to_ptr.vmem [resolvable:$true] %s200
          %206 = dma.hbm_to_vmem [thread:$0]  %s199, 6144, %s201, %s187, 384, 192, 12
        $region24: #{tpu_custom_call.1} parent=19 // pred_fallthru
          _
        // Predicated region
        $region25: #{tpu_custom_call.1} parent=19 // pred_check
          %p207 = pneg %p111
        $region26: #{tpu_custom_call.1} parent=19 // pred_check_branch
          %209 = sbr.rel (%p207) target = $region28
        $region27: #{tpu_custom_call.1} parent=19 // pred_region
          %s210 = sand.u32 %s16, 1
          %s211 = scalar_lea.sflag [#allocation7], %s210
          %s212 = sand.u32 %s101, 1
          %s213 = smul.addr %s212, 3
          %s214 = scalar_lea.vmem [#allocation8], %s213
          %s215 = smul.u32 3, %s24
          %s217 = ssub.s32 48, 48
          %218 = vsyncadd %s211, %s217
          %s219 = smul.addr %s215, 16
          %s220 = scalar_lea.hbm %s2, %s219
          %s222 = sshll.u32 %s214, 4
          %s223 = int_to_ptr.vmem [resolvable:$true] %s222
          %225 = dma.hbm_to_vmem [thread:$0]  %s220, 48, %s223, %s211
        $region28: #{tpu_custom_call.1} parent=19 // pred_fallthru
          _
      $region20: #{tpu_custom_call.1} parent=5 // pred_fallthru
        _
      %p226 = scmp.le.s32.totalorder 1, %s16
      %p227 = scmp.lt.s32.totalorder %s16, 3
      %p228 = pnand %p226, %p227
      %p229 = pneg %p228
      // Predicated region
      $region29: #{tpu_custom_call.1} parent=5 // pred_check
        _
      $region30: #{tpu_custom_call.1} parent=5 // pred_check_branch
        %231 = sbr.rel (%p228) target = $region32
      $region31: #{tpu_custom_call.1} parent=5 // pred_region
        %s232 = ssub.s32 %s16, 1
        // Predicated region
        $region33: #{tpu_custom_call.1} parent=31 // pred_check
          %p233 = pneg %p63
        $region34: #{tpu_custom_call.1} parent=31 // pred_check_branch
          %235 = sbr.rel (%p233) target = $region36
        $region35: #{tpu_custom_call.1} parent=31 // pred_region
          %236 = dma.done [#allocation4], 512
        $region36: #{tpu_custom_call.1} parent=31 // pred_fallthru
          _
        %s237 = sand.u32 %s21, 1
        %s238 = scalar_lea.sflag [#allocation7], %s237
        %s239 = sand.u32 %s78, 1
        %s240 = smul.addr %s239, 384
        %s241 = scalar_lea.vmem [#allocation6], %s240
        // Predicated region
        $region37: #{tpu_custom_call.1} parent=31 // pred_check
          %p242 = pneg %p91
        $region38: #{tpu_custom_call.1} parent=31 // pred_check_branch
          %244 = sbr.rel (%p242) target = $region40
        $region39: #{tpu_custom_call.1} parent=31 // pred_region
          %245 = dma.done %s238, 6144
        $region40: #{tpu_custom_call.1} parent=31 // pred_fallthru
          _
        %s246 = sand.u32 %s21, 1
        %s247 = scalar_lea.sflag [#allocation7], %s246
        %s248 = sand.u32 %s104, 1
        %s249 = smul.addr %s248, 3
        %s250 = scalar_lea.vmem [#allocation8], %s249
        // Predicated region
        $region41: #{tpu_custom_call.1} parent=31 // pred_check
          %p251 = pneg %p117
        $region42: #{tpu_custom_call.1} parent=31 // pred_check_branch
          %253 = sbr.rel (%p251) target = $region44
        $region43: #{tpu_custom_call.1} parent=31 // pred_region
          %254 = dma.done %s247, 48
        $region44: #{tpu_custom_call.1} parent=31 // pred_fallthru
          _
        %p255 = pneg %p63
        %p256 = pneg %p60
        %s257 = sand.u32 %s21, 1
        %s258 = scalar_lea.sflag [#allocation7], %s257
        %s259 = sand.u32 %s78, 1
        %s260 = smul.addr %s259, 384
        %s261 = scalar_lea.vmem [#allocation6], %s260
        %p262 = pneg %p91
        %p263 = pneg %p88
        %s264 = sand.u32 %s21, 1
        %s265 = scalar_lea.sflag [#allocation7], %s264
        %s266 = sand.u32 %s104, 1
        %s267 = smul.addr %s266, 3
        %s268 = scalar_lea.vmem [#allocation8], %s267
        %p269 = pneg %p117
        %p270 = pneg %p114
        %p271 = pneg %p145
        %p272 = pneg %p142
        %s273 = sand.u32 %s132, 1
        %s274 = scalar_lea.sflag [#allocation5], %s273
        %s275 = sand.u32 %s132, 1
        %s276 = smul.addr %s275, 48
        %s277 = scalar_lea.vmem [#allocation9], %s276
        %s278 = smul.u32 4, %s26
        %s279 = smul.u32 2, %s28
        %s280 = smul.u32 32, %s28
        %s281 = smul.u32 3, %s27
        %s282 = smul.u32 3, %s27
        %s283 = smul.u32 4, %s26
        %s284 = smul.u32 3, %s27
        %p286 = scmp.eq.s32.totalorder %s28, 0
        // Predicated region
        $region45: #{tpu_custom_call.1} parent=31 // pred_check
          %p287 = pneg %p286
        $region46: #{tpu_custom_call.1} parent=31 // pred_check_branch
          %289 = sbr.rel (%p287) target = $region48
        $region47: #{tpu_custom_call.1} parent=31 // pred_region
          %290 = vst [vmem:[#allocation2] sm:$0xff] 0.0
          %291 = vst [vmem:[#allocation2 + $0x8] sm:$0xff] 0.0
          %292 = vst [vmem:[#allocation2 + $0x10] sm:$0xff] 0.0
          %293 = vst [vmem:[#allocation2 + $0x18] sm:$0xff] 0.0
          %294 = vst [vmem:[#allocation2 + $0x20] sm:$0xff] 0.0
          %295 = vst [vmem:[#allocation2 + $0x28] sm:$0xff] 0.0
          %296 = vst [vmem:[#allocation2 + $0x30] sm:$0xff] 0.0
          %297 = vst [vmem:[#allocation2 + $0x38] sm:$0xff] 0.0
          %298 = vst [vmem:[#allocation2 + $0x40] sm:$0xff] 0.0
          %299 = vst [vmem:[#allocation2 + $0x48] sm:$0xff] 0.0
          %300 = vst [vmem:[#allocation2 + $0x50] sm:$0xff] 0.0
          %301 = vst [vmem:[#allocation2 + $0x58] sm:$0xff] 0.0
        $region48: #{tpu_custom_call.1} parent=31 // pred_fallthru
          _
        %v302 = vld [vmem:[#allocation2] sm:$0xff]
        %v303 = vld [vmem:[#allocation2 + $0x8] sm:$0xff]
        %v304 = vld [vmem:[#allocation2 + $0x10] sm:$0xff]
        %v305 = vld [vmem:[#allocation2 + $0x18] sm:$0xff]
        %v306 = vld [vmem:[#allocation2 + $0x20] sm:$0xff]
        %v307 = vld [vmem:[#allocation2 + $0x28] sm:$0xff]
        %v308 = vld [vmem:[#allocation2 + $0x30] sm:$0xff]
        %v309 = vld [vmem:[#allocation2 + $0x38] sm:$0xff]
        %v310 = vld [vmem:[#allocation2 + $0x40] sm:$0xff]
        %v311 = vld [vmem:[#allocation2 + $0x48] sm:$0xff]
        %v312 = vld [vmem:[#allocation2 + $0x50] sm:$0xff]
        %v313 = vld [vmem:[#allocation2 + $0x58] sm:$0xff]
        %v314 = vld [vmem:[#allocation3] sm:$0xff]
        %v315 = vld [vmem:[#allocation3 + $0x8] sm:$0xff]
        %v316 = vld [vmem:[#allocation3 + $0x10] sm:$0xff]
        %v317 = vld [vmem:[#allocation3 + $0x18] sm:$0xff]
        %v318 = vld [vmem:[%s241] sm:$0xff]
        %v319 = vld [vmem:[%s241 + $0x8] sm:$0xf]
        %v320 = vld [vmem:[%s241 + $0xc] sm:$0xff]
        %v321 = vld [vmem:[%s241 + $0x14] sm:$0xf]
        %v322 = vld [vmem:[%s241 + $0x18] sm:$0xff]
        %v323 = vld [vmem:[%s241 + $0x20] sm:$0xf]
        %v324 = vld [vmem:[%s241 + $0x24] sm:$0xff]
        %v325 = vld [vmem:[%s241 + $0x2c] sm:$0xf]
        %v326 = vld [vmem:[%s241 + $0x30] sm:$0xff]
        %v327 = vld [vmem:[%s241 + $0x38] sm:$0xf]
        %v328 = vld [vmem:[%s241 + $0x3c] sm:$0xff]
        %v329 = vld [vmem:[%s241 + $0x44] sm:$0xf]
        %v330 = vld [vmem:[%s241 + $0x48] sm:$0xff]
        %v331 = vld [vmem:[%s241 + $0x50] sm:$0xf]
        %v332 = vld [vmem:[%s241 + $0x54] sm:$0xff]
        %v333 = vld [vmem:[%s241 + $0x5c] sm:$0xf]
        %v334 = vld [vmem:[%s241 + $0x60] sm:$0xff]
        %v335 = vld [vmem:[%s241 + $0x68] sm:$0xf]
        %v336 = vld [vmem:[%s241 + $0x6c] sm:$0xff]
        %v337 = vld [vmem:[%s241 + $0x74] sm:$0xf]
        %v338 = vld [vmem:[%s241 + $0x78] sm:$0xff]
        %v339 = vld [vmem:[%s241 + $0x80] sm:$0xf]
        %v340 = vld [vmem:[%s241 + $0x84] sm:$0xff]
        %v341 = vld [vmem:[%s241 + $0x8c] sm:$0xf]
        %v342 = vld [vmem:[%s241 + $0x90] sm:$0xff]
        %v343 = vld [vmem:[%s241 + $0x98] sm:$0xf]
        %v344 = vld [vmem:[%s241 + $0x9c] sm:$0xff]
        %v345 = vld [vmem:[%s241 + $0xa4] sm:$0xf]
        %v346 = vld [vmem:[%s241 + $0xa8] sm:$0xff]
        %v347 = vld [vmem:[%s241 + $0xb0] sm:$0xf]
        %v348 = vld [vmem:[%s241 + $0xb4] sm:$0xff]
        %v349 = vld [vmem:[%s241 + $0xbc] sm:$0xf]
        %v350 = vld [vmem:[%s241 + $0xc0] sm:$0xff]
        %v351 = vld [vmem:[%s241 + $0xc8] sm:$0xf]
        %v352 = vld [vmem:[%s241 + $0xcc] sm:$0xff]
        %v353 = vld [vmem:[%s241 + $0xd4] sm:$0xf]
        %v354 = vld [vmem:[%s241 + $0xd8] sm:$0xff]
        %v355 = vld [vmem:[%s241 + $0xe0] sm:$0xf]
        %v356 = vld [vmem:[%s241 + $0xe4] sm:$0xff]
        %v357 = vld [vmem:[%s241 + $0xec] sm:$0xf]
        %v358 = vld [vmem:[%s241 + $0xf0] sm:$0xff]
        %v359 = vld [vmem:[%s241 + $0xf8] sm:$0xf]
        %v360 = vld [vmem:[%s241 + $0xfc] sm:$0xff]
        %v361 = vld [vmem:[%s241 + $0x104] sm:$0xf]
        %v362 = vld [vmem:[%s241 + $0x108] sm:$0xff]
        %v363 = vld [vmem:[%s241 + $0x110] sm:$0xf]
        %v364 = vld [vmem:[%s241 + $0x114] sm:$0xff]
        %v365 = vld [vmem:[%s241 + $0x11c] sm:$0xf]
        %v366 = vld [vmem:[%s241 + $0x120] sm:$0xff]
        %v367 = vld [vmem:[%s241 + $0x128] sm:$0xf]
        %v368 = vld [vmem:[%s241 + $0x12c] sm:$0xff]
        %v369 = vld [vmem:[%s241 + $0x134] sm:$0xf]
        %v370 = vld [vmem:[%s241 + $0x138] sm:$0xff]
        %v371 = vld [vmem:[%s241 + $0x140] sm:$0xf]
        %v372 = vld [vmem:[%s241 + $0x144] sm:$0xff]
        %v373 = vld [vmem:[%s241 + $0x14c] sm:$0xf]
        %v374 = vld [vmem:[%s241 + $0x150] sm:$0xff]
        %v375 = vld [vmem:[%s241 + $0x158] sm:$0xf]
        %v376 = vld [vmem:[%s241 + $0x15c] sm:$0xff]
        %v377 = vld [vmem:[%s241 + $0x164] sm:$0xf]
        %v378 = vld [vmem:[%s241 + $0x168] sm:$0xff]
        %v379 = vld [vmem:[%s241 + $0x170] sm:$0xf]
        %v380 = vld [vmem:[%s241 + $0x174] sm:$0xff]
        %v381 = vld [vmem:[%s241 + $0x17c] sm:$0xf]
        %v386 = vunpack.c.l.b16 %v314
        %v387 = vunpack.c.h.b16 %v314
        %v388 = vunpack.c.l.b16 %v315
        %v389 = vunpack.c.h.b16 %v315
        %v390 = vunpack.c.l.b16 %v316
        %v391 = vunpack.c.h.b16 %v316
        %v392 = vunpack.c.l.b16 %v317
        %v393 = vunpack.c.h.b16 %v317
        %v394 = vpack.c.b16 %v388, %v386
        %v395 = vpack.c.b16 %v389, %v387
        %v396 = vpack.c.b16 %v392, %v390
        %v397 = vpack.c.b16 %v393, %v391
        %v466 = vunpack.c.l.b16 %v318
        %v467 = vunpack.c.h.b16 %v318
        %v468 = vunpack.c.l.b16 %v319
        %v469 = vunpack.c.l.b16 %v320
        %v470 = vunpack.c.h.b16 %v320
        %v471 = vunpack.c.l.b16 %v321
        %v472 = vunpack.c.l.b16 %v322
        %v473 = vunpack.c.h.b16 %v322
        %v474 = vunpack.c.l.b16 %v323
        %v475 = vunpack.c.l.b16 %v324
        %v476 = vunpack.c.h.b16 %v324
        %v477 = vunpack.c.l.b16 %v325
        %v478 = vunpack.c.l.b16 %v326
        %v479 = vunpack.c.h.b16 %v326
        %v480 = vunpack.c.l.b16 %v327
        %v481 = vunpack.c.l.b16 %v328
        %v482 = vunpack.c.h.b16 %v328
        %v483 = vunpack.c.l.b16 %v329
        %v484 = vunpack.c.l.b16 %v330
        %v485 = vunpack.c.h.b16 %v330
        %v486 = vunpack.c.l.b16 %v331
        %v487 = vunpack.c.l.b16 %v332
        %v488 = vunpack.c.h.b16 %v332
        %v489 = vunpack.c.l.b16 %v333
        %v490 = vunpack.c.l.b16 %v334
        %v491 = vunpack.c.h.b16 %v334
        %v492 = vunpack.c.l.b16 %v335
        %v493 = vunpack.c.l.b16 %v336
        %v494 = vunpack.c.h.b16 %v336
        %v495 = vunpack.c.l.b16 %v337
        %v496 = vunpack.c.l.b16 %v338
        %v497 = vunpack.c.h.b16 %v338
        %v498 = vunpack.c.l.b16 %v339
        %v499 = vunpack.c.l.b16 %v340
        %v500 = vunpack.c.h.b16 %v340
        %v501 = vunpack.c.l.b16 %v341
        %v502 = vunpack.c.l.b16 %v342
        %v503 = vunpack.c.h.b16 %v342
        %v504 = vunpack.c.l.b16 %v343
        %v505 = vunpack.c.l.b16 %v344
        %v506 = vunpack.c.h.b16 %v344
        %v507 = vunpack.c.l.b16 %v345
        %v508 = vunpack.c.l.b16 %v346
        %v509 = vunpack.c.h.b16 %v346
        %v510 = vunpack.c.l.b16 %v347
        %v511 = vunpack.c.l.b16 %v348
        %v512 = vunpack.c.h.b16 %v348
        %v513 = vunpack.c.l.b16 %v349
        %v514 = vunpack.c.l.b16 %v350
        %v515 = vunpack.c.h.b16 %v350
        %v516 = vunpack.c.l.b16 %v351
        %v517 = vunpack.c.l.b16 %v352
        %v518 = vunpack.c.h.b16 %v352
        %v519 = vunpack.c.l.b16 %v353
        %v520 = vunpack.c.l.b16 %v354
        %v521 = vunpack.c.h.b16 %v354
        %v522 = vunpack.c.l.b16 %v355
        %v523 = vunpack.c.l.b16 %v356
        %v524 = vunpack.c.h.b16 %v356
        %v525 = vunpack.c.l.b16 %v357
        %v526 = vunpack.c.l.b16 %v358
        %v527 = vunpack.c.h.b16 %v358
        %v528 = vunpack.c.l.b16 %v359
        %v529 = vunpack.c.l.b16 %v360
        %v530 = vunpack.c.h.b16 %v360
        %v531 = vunpack.c.l.b16 %v361
        %v532 = vunpack.c.l.b16 %v362
        %v533 = vunpack.c.h.b16 %v362
        %v534 = vunpack.c.l.b16 %v363
        %v535 = vunpack.c.l.b16 %v364
        %v536 = vunpack.c.h.b16 %v364
        %v537 = vunpack.c.l.b16 %v365
        %v538 = vunpack.c.l.b16 %v366
        %v539 = vunpack.c.h.b16 %v366
        %v540 = vunpack.c.l.b16 %v367
        %v541 = vunpack.c.l.b16 %v368
        %v542 = vunpack.c.h.b16 %v368
        %v543 = vunpack.c.l.b16 %v369
        %v544 = vunpack.c.l.b16 %v370
        %v545 = vunpack.c.h.b16 %v370
        %v546 = vunpack.c.l.b16 %v371
        %v547 = vunpack.c.l.b16 %v372
        %v548 = vunpack.c.h.b16 %v372
        %v549 = vunpack.c.l.b16 %v373
        %v550 = vunpack.c.l.b16 %v374
        %v551 = vunpack.c.h.b16 %v374
        %v552 = vunpack.c.l.b16 %v375
        %v553 = vunpack.c.l.b16 %v376
        %v554 = vunpack.c.h.b16 %v376
        %v555 = vunpack.c.l.b16 %v377
        %v556 = vunpack.c.l.b16 %v378
        %v557 = vunpack.c.h.b16 %v378
        %v558 = vunpack.c.l.b16 %v379
        %v559 = vunpack.c.l.b16 %v380
        %v560 = vunpack.c.h.b16 %v380
        %v561 = vunpack.c.l.b16 %v381
        %v562 = vpack.c.b16 %v469, %v466
        %v563 = vpack.c.b16 %v470, %v467
        %v564 = vpack.c.b16 %v471, %v468
        %v565 = vpack.c.b16 %v475, %v472
        %v566 = vpack.c.b16 %v476, %v473
        %v567 = vpack.c.b16 %v477, %v474
        %v568 = vpack.c.b16 %v481, %v478
        %v569 = vpack.c.b16 %v482, %v479
        %v570 = vpack.c.b16 %v483, %v480
        %v571 = vpack.c.b16 %v487, %v484
        %v572 = vpack.c.b16 %v488, %v485
        %v573 = vpack.c.b16 %v489, %v486
        %v574 = vpack.c.b16 %v493, %v490
        %v575 = vpack.c.b16 %v494, %v491
        %v576 = vpack.c.b16 %v495, %v492
        %v577 = vpack.c.b16 %v499, %v496
        %v578 = vpack.c.b16 %v500, %v497
        %v579 = vpack.c.b16 %v501, %v498
        %v580 = vpack.c.b16 %v505, %v502
        %v581 = vpack.c.b16 %v506, %v503
        %v582 = vpack.c.b16 %v507, %v504
        %v583 = vpack.c.b16 %v511, %v508
        %v584 = vpack.c.b16 %v512, %v509
        %v585 = vpack.c.b16 %v513, %v510
        %v586 = vpack.c.b16 %v517, %v514
        %v587 = vpack.c.b16 %v518, %v515
        %v588 = vpack.c.b16 %v519, %v516
        %v589 = vpack.c.b16 %v523, %v520
        %v590 = vpack.c.b16 %v524, %v521
        %v591 = vpack.c.b16 %v525, %v522
        %v592 = vpack.c.b16 %v529, %v526
        %v593 = vpack.c.b16 %v530, %v527
        %v594 = vpack.c.b16 %v531, %v528
        %v595 = vpack.c.b16 %v535, %v532
        %v596 = vpack.c.b16 %v536, %v533
        %v597 = vpack.c.b16 %v537, %v534
        %v598 = vpack.c.b16 %v541, %v538
        %v599 = vpack.c.b16 %v542, %v539
        %v600 = vpack.c.b16 %v543, %v540
        %v601 = vpack.c.b16 %v547, %v544
        %v602 = vpack.c.b16 %v548, %v545
        %v603 = vpack.c.b16 %v549, %v546
        %v604 = vpack.c.b16 %v553, %v550
        %v605 = vpack.c.b16 %v554, %v551
        %v606 = vpack.c.b16 %v555, %v552
        %v607 = vpack.c.b16 %v559, %v556
        %v608 = vpack.c.b16 %v560, %v557
        %v609 = vpack.c.b16 %v561, %v558
        %658 = vmatprep.subr.bf16.mxu0 %v563
        %659 = vmatpush1.bf16.msra.mxu0 %v562
        %660 = vmatprep.subr.bf16.mxu0 %v566
        %661 = vmatpush1.bf16.msra.mxu0 %v565
        %662 = vmatprep.subr.bf16.mxu0 %v569
        %663 = vmatpush1.bf16.msra.mxu0 %v568
        %664 = vmatprep.subr.bf16.mxu0 %v572
        %665 = vmatpush1.bf16.msra.mxu0 %v571
        %666 = vmatprep.subr.bf16.mxu0 %v575
        %667 = vmatpush1.bf16.msra.mxu0 %v574
        %668 = vmatprep.subr.bf16.mxu0 %v578
        %669 = vmatpush1.bf16.msra.mxu0 %v577
        %670 = vmatprep.subr.bf16.mxu0 %v581
        %671 = vmatpush1.bf16.msra.mxu0 %v580
        %672 = vmatprep.subr.bf16.mxu0 %v584
        %673 = vmatpush1.bf16.msra.mxu0 %v583
        %674 = vmatprep.subr.bf16.mxu0 %v587
        %675 = vmatpush1.bf16.msra.mxu0 %v586
        %676 = vmatprep.subr.bf16.mxu0 %v590
        %677 = vmatpush1.bf16.msra.mxu0 %v589
        %678 = vmatprep.subr.bf16.mxu0 %v593
        %679 = vmatpush1.bf16.msra.mxu0 %v592
        %680 = vmatprep.subr.bf16.mxu0 %v596
        %681 = vmatpush1.bf16.msra.mxu0 %v595
        %682 = vmatprep.subr.bf16.mxu0 %v599
        %683 = vmatpush1.bf16.msra.mxu0 %v598
        %684 = vmatprep.subr.bf16.mxu0 %v602
        %685 = vmatpush1.bf16.msra.mxu0 %v601
        %686 = vmatprep.subr.bf16.mxu0 %v605
        %687 = vmatpush1.bf16.msra.mxu0 %v604
        %688 = vmatprep.subr.bf16.mxu0 %v608
        %689 = vmatpush1.bf16.msra.mxu0 %v607
        %690 = vmatprep.mubr.bf16.mxu0 %v395
        %691 = vmatmul.mubr.bf16.gmra.mrb[0].mxu0 %v394
        %v692 = vpop.f32.mrb[0].mxu0
        %v693 = vadd.f32 0.0, %v692
        %v694 = vpop.f32.mrb[0].mxu0
        %v695 = vadd.f32 0.0, %v694
        %v696 = vpop.f32.mrb[0].mxu0
        %v697 = vadd.f32 0.0, %v696
        %v698 = vpop.f32.mrb[0].mxu0
        %v699 = vadd.f32 0.0, %v698
        %700 = vmatprep.mubr.bf16.mxu0 %v397
        %701 = vmatmul.mubr.bf16.gmra.mrb[0].mxu0 %v396
        %v702 = vpop.f32.mrb[0].mxu0
        %v703 = vadd.f32 0.0, %v702
        %v704 = vpop.f32.mrb[0].mxu0
        %v705 = vadd.f32 0.0, %v704
        %v706 = vpop.f32.mrb[0].mxu0
        %v707 = vadd.f32 0.0, %v706
        %v708 = vpop.f32.mrb[0].mxu0
        %v709 = vadd.f32 0.0, %v708
        %710 = vdwg.mxu0
        %711 = vmatprep.subr.bf16.mxu0 0
        %712 = vmatpush1.bf16.msra.mxu0 %v564
        %713 = vmatprep.subr.bf16.mxu0 0
        %714 = vmatpush1.bf16.msra.mxu0 %v567
        %715 = vmatprep.subr.bf16.mxu0 0
        %716 = vmatpush1.bf16.msra.mxu0 %v570
        %717 = vmatprep.subr.bf16.mxu0 0
        %718 = vmatpush1.bf16.msra.mxu0 %v573
        %719 = vmatprep.subr.bf16.mxu0 0
        %720 = vmatpush1.bf16.msra.mxu0 %v576
        %721 = vmatprep.subr.bf16.mxu0 0
        %722 = vmatpush1.bf16.msra.mxu0 %v579
        %723 = vmatprep.subr.bf16.mxu0 0
        %724 = vmatpush1.bf16.msra.mxu0 %v582
        %725 = vmatprep.subr.bf16.mxu0 0
        %726 = vmatpush1.bf16.msra.mxu0 %v585
        %727 = vmatprep.subr.bf16.mxu0 0
        %728 = vmatpush1.bf16.msra.mxu0 %v588
        %729 = vmatprep.subr.bf16.mxu0 0
        %730 = vmatpush1.bf16.msra.mxu0 %v591
        %731 = vmatprep.subr.bf16.mxu0 0
        %732 = vmatpush1.bf16.msra.mxu0 %v594
        %733 = vmatprep.subr.bf16.mxu0 0
        %734 = vmatpush1.bf16.msra.mxu0 %v597
        %735 = vmatprep.subr.bf16.mxu0 0
        %736 = vmatpush1.bf16.msra.mxu0 %v600
        %737 = vmatprep.subr.bf16.mxu0 0
        %738 = vmatpush1.bf16.msra.mxu0 %v603
        %739 = vmatprep.subr.bf16.mxu0 0
        %740 = vmatpush1.bf16.msra.mxu0 %v606
        %741 = vmatprep.subr.bf16.mxu0 0
        %742 = vmatpush1.bf16.msra.mxu0 %v609
        %743 = vmatprep.mubr.bf16.mxu0 %v395
        %744 = vmatmul.mubr.bf16.gmra.mrb[0].mxu0 %v394
        %v745 = vpop.f32.mrb[0].mxu0
        %v746 = vadd.f32 0.0, %v745
        %v747 = vpop.f32.mrb[0].mxu0
        %v748 = vpop.f32.mrb[0].mxu0
        %v749 = vadd.f32 0.0, %v748
        %v750 = vpop.f32.mrb[0].mxu0
        %751 = vmatprep.mubr.bf16.mxu0 %v397
        %752 = vmatmul.mubr.bf16.gmra.mrb[0].mxu0 %v396
        %v753 = vpop.f32.mrb[0].mxu0
        %v754 = vadd.f32 0.0, %v753
        %v755 = vpop.f32.mrb[0].mxu0
        %v756 = vpop.f32.mrb[0].mxu0
        %v757 = vadd.f32 0.0, %v756
        %v758 = vpop.f32.mrb[0].mxu0
        %759 = vdwg.mxu0
        %v760 = vadd.f32 %v302, %v693
        %v761 = vadd.f32 %v303, %v695
        %v762 = vadd.f32 %v304, %v746
        %v763 = vadd.f32 %v305, %v697
        %v764 = vadd.f32 %v306, %v699
        %v765 = vadd.f32 %v307, %v749
        %v766 = vadd.f32 %v308, %v703
        %v767 = vadd.f32 %v309, %v705
        %v768 = vadd.f32 %v310, %v754
        %v769 = vadd.f32 %v311, %v707
        %v770 = vadd.f32 %v312, %v709
        %v771 = vadd.f32 %v313, %v757
        %772 = vst [vmem:[#allocation2] sm:$0xff] %v760
        %773 = vst [vmem:[#allocation2 + $0x8] sm:$0xff] %v761
        %774 = vst [vmem:[#allocation2 + $0x10] sm:$0xff] %v762
        %775 = vst [vmem:[#allocation2 + $0x18] sm:$0xff] %v763
        %776 = vst [vmem:[#allocation2 + $0x20] sm:$0xff] %v764
        %777 = vst [vmem:[#allocation2 + $0x28] sm:$0xff] %v765
        %778 = vst [vmem:[#allocation2 + $0x30] sm:$0xff] %v766
        %779 = vst [vmem:[#allocation2 + $0x38] sm:$0xff] %v767
        %780 = vst [vmem:[#allocation2 + $0x40] sm:$0xff] %v768
        %781 = vst [vmem:[#allocation2 + $0x48] sm:$0xff] %v769
        %782 = vst [vmem:[#allocation2 + $0x50] sm:$0xff] %v770
        %783 = vst [vmem:[#allocation2 + $0x58] sm:$0xff] %v771
        // Predicated region
        $region49: #{tpu_custom_call.1} parent=31 // pred_check
          %p784 = pneg %p286
        $region50: #{tpu_custom_call.1} parent=31 // pred_check_branch
          %786 = sbr.rel (%p784) target = $region52
        $region51: #{tpu_custom_call.1} parent=31 // pred_region
          %v787 = vld [vmem:[#allocation2] sm:$0xff]
          %v788 = vld [vmem:[#allocation2 + $0x8] sm:$0xff]
          %v789 = vld [vmem:[#allocation2 + $0x10] sm:$0xff]
          %v790 = vld [vmem:[#allocation2 + $0x18] sm:$0xff]
          %v791 = vld [vmem:[#allocation2 + $0x20] sm:$0xff]
          %v792 = vld [vmem:[#allocation2 + $0x28] sm:$0xff]
          %v793 = vld [vmem:[#allocation2 + $0x30] sm:$0xff]
          %v794 = vld [vmem:[#allocation2 + $0x38] sm:$0xff]
          %v795 = vld [vmem:[#allocation2 + $0x40] sm:$0xff]
          %v796 = vld [vmem:[#allocation2 + $0x48] sm:$0xff]
          %v797 = vld [vmem:[#allocation2 + $0x50] sm:$0xff]
          %v798 = vld [vmem:[#allocation2 + $0x58] sm:$0xff]
          %v799 = vld [vmem:[%s250] sm:$0x7]
          %v801 = vlaneseq
          %v802 = vshrl.u32 %v801, 7
          %v803 = vsub.s32 0, %v802
          %v804 = vrot.slane %v799, %v803
          %v805 = vlaneseq
          %v806 = vshrl.u32 %v805, 7
          %v807 = vsub.s32 1, %v806
          %v808 = vrot.slane %v799, %v807
          %v809 = vlaneseq
          %v810 = vshrl.u32 %v809, 7
          %v811 = vsub.s32 2, %v810
          %v812 = vrot.slane %v799, %v811
          %v816 = vadd.f32 %v787, %v804
          %v817 = vadd.f32 %v788, %v808
          %v818 = vadd.f32 %v789, %v812
          %v819 = vadd.f32 %v790, %v804
          %v820 = vadd.f32 %v791, %v808
          %v821 = vadd.f32 %v792, %v812
          %v822 = vadd.f32 %v793, %v804
          %v823 = vadd.f32 %v794, %v808
          %v824 = vadd.f32 %v795, %v812
          %v825 = vadd.f32 %v796, %v804
          %v826 = vadd.f32 %v797, %v808
          %v827 = vadd.f32 %v798, %v812
          %v828 = vpack.c.bf16 %v819, %v816
          %v829 = vpack.c.bf16 %v820, %v817
          %v830 = vpack.c.bf16 %v821, %v818
          %v831 = vpack.c.bf16 %v825, %v822
          %v832 = vpack.c.bf16 %v826, %v823
          %v833 = vpack.c.bf16 %v827, %v824
          %v840 = vunpack.c.l.b16 %v828
          %v841 = vunpack.c.l.b16 %v829
          %v842 = vunpack.c.l.b16 %v830
          %v843 = vunpack.c.h.b16 %v828
          %v844 = vunpack.c.h.b16 %v829
          %v845 = vunpack.c.h.b16 %v830
          %v846 = vunpack.c.l.b16 %v831
          %v847 = vunpack.c.l.b16 %v832
          %v848 = vunpack.c.l.b16 %v833
          %v849 = vunpack.c.h.b16 %v831
          %v850 = vunpack.c.h.b16 %v832
          %v851 = vunpack.c.h.b16 %v833
          %v852 = vpack.c.b16 %v841, %v840
          %v853 = vpack.c.b16 %v842, %v842
          %v854 = vpack.c.b16 %v844, %v843
          %v855 = vpack.c.b16 %v845, %v845
          %v856 = vpack.c.b16 %v847, %v846
          %v857 = vpack.c.b16 %v848, %v848
          %v858 = vpack.c.b16 %v850, %v849
          %v859 = vpack.c.b16 %v851, %v851
          %868 = vst [vmem:[%s277] sm:$0xff] %v852
          %869 = vst [vmem:[%s277 + $0x8] sm:$0xf] %v853
          %870 = vst [vmem:[%s277 + $0xc] sm:$0xff] %v854
          %871 = vst [vmem:[%s277 + $0x14] sm:$0xf] %v855
          %872 = vst [vmem:[%s277 + $0x18] sm:$0xff] %v856
          %873 = vst [vmem:[%s277 + $0x20] sm:$0xf] %v857
          %874 = vst [vmem:[%s277 + $0x24] sm:$0xff] %v858
          %875 = vst [vmem:[%s277 + $0x2c] sm:$0xf] %v859
        $region52: #{tpu_custom_call.1} parent=31 // pred_fallthru
          _
        %s876 = sand.u32 %s132, 1
        %s877 = scalar_lea.sflag [#allocation5], %s876
        %s878 = sand.u32 %s132, 1
        %s879 = smul.addr %s878, 48
        %s880 = scalar_lea.vmem [#allocation9], %s879
        // Predicated region
        $region53: #{tpu_custom_call.1} parent=31 // pred_check
          %p881 = pneg %p142
        $region54: #{tpu_custom_call.1} parent=31 // pred_check_branch
          %883 = sbr.rel (%p881) target = $region56
        $region55: #{tpu_custom_call.1} parent=31 // pred_region
          %s884 = smul.u32 4, %s26
          %s885 = smul.u32 3, %s27
          %s887 = ssub.s32 768, 768
          %888 = vsyncadd %s877, %s887
          %s889 = smul.addr %s884, 6
          %s890 = sadd.s32 %s885, %s889
          %s891 = smul.addr %s890, 64
          %s892 = scalar_lea.hbm %s3, %s891
          %s893 = sshll.u32 %s880, 4
          %s894 = int_to_ptr.vmem [resolvable:$true] %s893
          %899 = dma.vmem_to_hbm [thread:$0]  %s894, 768, %s892, %s877, 192, 384, 12
        $region56: #{tpu_custom_call.1} parent=31 // pred_fallthru
          _
      $region32: #{tpu_custom_call.1} parent=5 // pred_fallthru
        _
      %p900 = scmp.le.s32.totalorder 2, %s16
      // Predicated region
      $region57: #{tpu_custom_call.1} parent=5 // pred_check
        %p901 = pneg %p900
      $region58: #{tpu_custom_call.1} parent=5 // pred_check_branch
        %903 = sbr.rel (%p901) target = $region60
      $region59: #{tpu_custom_call.1} parent=5 // pred_region
        %s904 = ssub.s32 %s16, 2
        // Predicated region
        $region61: #{tpu_custom_call.1} parent=59 // pred_check
          %p905 = pneg %p148
        $region62: #{tpu_custom_call.1} parent=59 // pred_check_branch
          %907 = sbr.rel (%p905) target = $region64
        $region63: #{tpu_custom_call.1} parent=59 // pred_region
          %s908 = sand.u32 %s133, 1
          %s909 = scalar_lea.sflag [#allocation5], %s908
          %s910 = sand.u32 %s133, 1
          %s911 = smul.addr %s910, 48
          %s912 = scalar_lea.vmem [#allocation9], %s911
          %913 = dma.done %s909, 768
        $region64: #{tpu_custom_call.1} parent=59 // pred_fallthru
          _
      $region60: #{tpu_custom_call.1} parent=5 // pred_fallthru
        _
    $region6: #{tpu_custom_call.1} parent=1 // loop_footer
      %s20 = sadd.s32 1, %s16
    $region7: #{tpu_custom_call.1} parent=1 // loop_footer_branch
      %15 = sbr.rel target = $region3
    $region8: #{tpu_custom_call.1} parent=1 // loop_exit
      _
    %914 = vsyncpa [#allocation4], 1
    %s915 = scalar_lea.sflag [#allocation4], 1
    %916 = vsyncpa %s915, 1
    %917 = vsyncpa [#allocation7], 1
    %s918 = scalar_lea.sflag [#allocation7], 1
    %919 = vsyncpa %s918, 1
    %920 = vsyncpa [#allocation5], 1
    %s921 = scalar_lea.sflag [#allocation5], 1
    %922 = vsyncpa %s921, 1

</llo_original>
